<compile_context>
chip_gen: v7x
topology: tpu7x:2x2x1
jax: 0.10.0
libtpu: 0.0.40
codegen_flags: <defaults>
</compile_context>

<pallas_src>
import functools
import math

import jax
import jax.numpy as jnp
from jax.experimental import pallas as pl
from jax.experimental.pallas import tpu as pltpu


def _round_up(x: int, m: int) -> int:
    return ((x + m - 1) // m) * m


def _gelu_tanh(x):
    # gelu_pytorch_tanh: tanh approximation of GELU (F.gelu(approximate="tanh")).
    c = jnp.float32(0.7978845608028654)  # sqrt(2/pi)
    return 0.5 * x * (1.0 + jnp.tanh(c * (x + 0.044715 * x * x * x)))


def _ffn_kernel(x_ref, w1_ref, b1_ref, w2_ref, b2_ref, o_ref, acc_ref):
    # x_ref : (tm, Hp)   bf16 row tile
    # w1_ref: (Hp, tk)   bf16 w1 column tile (k-th inner-dim slice)
    # b1_ref: (1,  tk)   f32  bias tile for the k-th slice
    # w2_ref: (tk, Hp)   bf16 w2 row tile (k-th inner-dim slice)
    # b2_ref: (1,  Hp)   f32  output bias (folded into the accumulator init)
    # o_ref : (tm, Hp)   output tile (model dtype)
    # acc_ref:(tm, Hp)   f32 VMEM accumulator (persists across the k axis)
    k = pl.program_id(1)

    @pl.when(k == 0)
    def _():
        # Fold b2 into the accumulator init (removes a VALU add from the epilogue).
        acc_ref[...] = jnp.broadcast_to(b2_ref[...], acc_ref.shape)

    # First projection for this inner-dim slice (f32 accumulate on the MXU).
    h = jnp.dot(x_ref[...], w1_ref[...], preferred_element_type=jnp.float32)
    h = h + b1_ref[...]                      # b1 is per-inner-slice, added here
    a = _gelu_tanh(h)                        # GELU in f32 on the (tm, tk) tile

    # Second projection slice, accumulated into the f32 scratch.
    acc_ref[...] += jnp.dot(a.astype(w2_ref.dtype), w2_ref[...],
                            preferred_element_type=jnp.float32)

    @pl.when(k == pl.num_programs(1) - 1)
    def _():
        # Just a cast + store: b2 was already folded into the init.
        o_ref[...] = acc_ref[...].astype(o_ref.dtype)


@functools.lru_cache(maxsize=1)
def _device_config():
    """(tm_default, tk_default, vmem_cap_bytes, two_cores) for the local TPU."""
    kind = ""
    try:
        kind = jax.devices()[0].device_kind.lower()
    except Exception:
        pass

    if "v7" in kind:
        cfg = (512, 512, 64 * 1024 * 1024, True)          # v7x: 64 MiB VMEM/TC, 2 TCs
    elif "v6" in kind:
        cfg = (1024, 512, 128 * 1024 * 1024, False)        # v6e: push past roofline knee
    elif "v5" in kind and ("lite" in kind or "5e" in kind):
        cfg = (256, 2048, 128 * 1024 * 1024, False)        # v5e: compute-bound at tm=256
    elif "v5" in kind or "v4" in kind:
        cfg = (512, 1024, 128 * 1024 * 1024, False)
    else:
        # Unknown chip: conservative config that fits a 64 MiB VMEM part.
        cfg = (512, 512, 64 * 1024 * 1024, True)

    # Refine VMEM capacity from the hardware query when available.
    try:
        cap = int(pltpu.get_tpu_info().vmem_capacity_bytes)
        if cap >= (16 << 20):
            cfg = (cfg[0], cfg[1], cap, cfg[3])
    except Exception:
        pass
    return cfg


def _pad_cast_2d(a, rows, cols, dtype):
    """Zero-pad `a` to (rows, cols) and cast; short-circuits when already sized."""
    r, c = a.shape
    if r == rows and c == cols:
        return a if a.dtype == dtype else a.astype(dtype)
    out = jnp.zeros((rows, cols), dtype)
    return out.at[:r, :c].set(a.astype(dtype))


@functools.partial(jax.jit,
                   static_argnames=("tm", "tk", "Hp", "Ip", "Mp",
                                    "vmem_limit", "compute_dtype"))
def _ffn_pallas(xm, w1, b1, w2, b2, *, tm, tk, Hp, Ip, Mp, vmem_limit,
                compute_dtype):
    M, H = xm.shape
    I = w1.shape[1]
    out_dtype = xm.dtype
    c_item = jnp.dtype(compute_dtype).itemsize
    o_item = jnp.dtype(out_dtype).itemsize

    # Zero-pad operands (no-ops when dims are already lane-dense & dtypes match).
    # Zero-padded inner columns give gelu(0)=0 against zero w2 rows, so padding
    # contributes exactly nothing to the real outputs.
    xm_p = _pad_cast_2d(xm, Mp, Hp, compute_dtype)
    w1_p = _pad_cast_2d(w1, Hp, Ip, compute_dtype)
    w2_p = _pad_cast_2d(w2, Ip, Hp, compute_dtype)
    b1_p = _pad_cast_2d(b1.reshape(1, -1), 1, Ip, jnp.float32)
    b2_p = _pad_cast_2d(b2.reshape(1, -1), 1, Hp, jnp.float32)

    grid = (Mp // tm, Ip // tk)
    nk = grid[1]

    # Serpentine the k axis on odd row tiles: kk == k (even i), nk-1-k (odd i),
    # so the last weight slice of row tile i is re-used as the first of tile i+1
    # and its DMA is skipped by the pipeline.
    def _w1_map(i, k):
        return (0, k + (i % 2) * (nk - 1 - 2 * k))

    def _b1_map(i, k):
        return (0, k + (i % 2) * (nk - 1 - 2 * k))

    def _w2_map(i, k):
        return (k + (i % 2) * (nk - 1 - 2 * k), 0)

    # Advisory cost hint for the XLA scheduler.
    cost = pl.CostEstimate(
        flops=4 * Mp * Hp * Ip,                 # two matmuls, 2*M*H*I each
        transcendentals=Mp * Ip,                # tanh per inner activation
        bytes_accessed=(Mp * Hp * c_item                       # x read
                        + grid[0] * 2 * Hp * Ip * c_item       # streamed weights
                        + Mp * Hp * o_item),                   # output write
    )

    out = pl.pallas_call(
        _ffn_kernel,
        out_shape=jax.ShapeDtypeStruct((Mp, Hp), out_dtype),
        grid_spec=pltpu.PrefetchScalarGridSpec(
            num_scalar_prefetch=0,
            grid=grid,
            in_specs=[
                pl.BlockSpec((tm, Hp), lambda i, k: (i, 0)),   # x row tile
                pl.BlockSpec((Hp, tk), _w1_map),               # w1 inner-slice
                pl.BlockSpec((1, tk), _b1_map),                # b1 inner-slice
                pl.BlockSpec((tk, Hp), _w2_map),               # w2 inner-slice
                pl.BlockSpec((1, Hp), lambda i, k: (0, 0)),    # b2
            ],
            out_specs=pl.BlockSpec((tm, Hp), lambda i, k: (i, 0)),
            scratch_shapes=[pltpu.VMEM((tm, Hp), jnp.float32)],
        ),
        compiler_params=pltpu.CompilerParams(
            dimension_semantics=("parallel", "arbitrary"),
            vmem_limit_bytes=vmem_limit,
        ),
        cost_estimate=cost,
    )(xm_p, w1_p, b1_p, w2_p, b2_p)

    return out[:M, :H]


def feed_forward(x, w1, b1, w2, b2, *, tm=None, tk=None,
                 compute_dtype=jnp.bfloat16):
    """x: (..., H). w1: (H, I), b1: (I,), w2: (I, H), b2: (H,).

    Matmul operands are cast to `compute_dtype` (bf16 by default) with f32
    accumulation; the output keeps x.dtype.
    """
    orig_shape = x.shape
    H = orig_shape[-1]
    I = w1.shape[1]
    xm = x.reshape(-1, H)
    M = xm.shape[0]

    tm_def, tk_def, vmem_cap, two_cores = _device_config()
    tm = tm_def if tm is None else tm
    tk = tk_def if tk is None else tk

    c_item = jnp.dtype(compute_dtype).itemsize
    o_item = jnp.dtype(x.dtype).itemsize

    # Lane-dense (multiple-of-128) feature dims.
    Hp = _round_up(H, 128)
    Ip0 = _round_up(I, 128)
    tk = min(tk, Ip0)

    # Megacore (2-TC) chips: keep >=2 row tiles so the "parallel" axis can shard.
    if two_cores and M > 256:
        tm = min(tm, max(256, _round_up(-(-M // 2), 256)))
    # Small-M clamp (min 16 rows so bf16 (16,128) min-tile rule always holds).
    tm = max(16, min(tm, _round_up(M, 16)))

    # VMEM footprint estimate, including the (tm, tk) f32 GELU intermediate and
    # its bf16 recast; shrink tiles until it fits the device with headroom.
    def _est(tm_, tk_):
        return (2 * tm_ * Hp * c_item        # x tiles (double-buffered)
                + 2 * Hp * tk_ * c_item      # w1 tiles
                + 2 * tk_ * Hp * c_item      # w2 tiles
                + 2 * (tk_ + Hp) * 4         # bias tiles (f32)
                + 2 * tm_ * Hp * o_item      # output tiles
                + tm_ * Hp * 4               # f32 accumulator scratch
                + tm_ * tk_ * (4 + c_item))  # GELU f32 intermediate + bf16 recast

    headroom = 6 << 20
    while _est(tm, tk) > vmem_cap - headroom and tk > 256:
        tk = max(256, _round_up(tk // 2, 128))
    while _est(tm, tk) > vmem_cap - headroom and tm > 256:
        tm = max(256, _round_up(tm // 2, 16))

    Mp = _round_up(M, tm)
    Ip = _round_up(Ip0, tk)   # make tk divide the padded inner dim

    # Scoped-VMEM limit: margin for Mosaic internal scratch, clamped to the
    # device's real VMEM capacity (v7x has only 64 MiB per TensorCore).
    vmem_limit = int(_est(tm, tk) * 1.2) + (2 << 20)
    vmem_limit = max(16 << 20, vmem_limit)
    vmem_limit = min(vmem_limit, vmem_cap - (2 << 20))

    out = _ffn_pallas(xm, w1, b1, w2, b2, tm=tm, tk=tk, Hp=Hp, Ip=Ip, Mp=Mp,
                      vmem_limit=vmem_limit, compute_dtype=compute_dtype)
    return out.reshape(orig_shape)


def _reference(x, w1, b1, w2, b2):
    h = x @ w1 + b1
    a = _gelu_tanh(h)
    return a @ w2 + b2


if __name__ == "__main__":
    key = jax.random.PRNGKey(0)

    batch, seq, hidden_dim = 2, 8, 32
    mlp_scale = 4.0
    inner_dim = int(hidden_dim * mlp_scale)  # 128

    k_x, k_w1, k_b1, k_w2, k_b2 = jax.random.split(key, 5)

    # Deterministic synthetic parameters (shapes per nn.Linear in __init__).
    # Stored as (in, out) so the kernel computes x @ W (== PyTorch x @ W.T).
    x = jax.random.normal(k_x, (batch, seq, hidden_dim), dtype=jnp.float32)
    w1 = jax.random.normal(k_w1, (hidden_dim, inner_dim), dtype=jnp.float32) * 0.05
    b1 = jax.random.normal(k_b1, (inner_dim,), dtype=jnp.float32) * 0.05
    w2 = jax.random.normal(k_w2, (inner_dim, hidden_dim), dtype=jnp.float32) * 0.05
    b2 = jax.random.normal(k_b2, (hidden_dim,), dtype=jnp.float32) * 0.05

    out = feed_forward(x, w1, b1, w2, b2)
    out = jax.block_until_ready(out)

    ref = _reference(x, w1, b1, w2, b2)
    assert out.shape == x.shape
    # bf16 matmul operands with f32 accumulation -> ~1e-2 tolerance vs f32 ref.
    assert jnp.allclose(out, ref, atol=2e-2, rtol=2e-2), "mismatch vs reference"

    print("KERNEL_OK")
</pallas_src>

<mosaic_0001>
module attributes {stable_mosaic.version = 11 : i64} {
  func.func @_ffn_kernel(%arg0: i32, %arg1: i32, %arg2: memref<16x128xbf16, #tpu.memory_space<vmem>>, %arg3: memref<128x128xbf16, #tpu.memory_space<vmem>>, %arg4: memref<1x128xf32, #tpu.memory_space<vmem>>, %arg5: memref<128x128xbf16, #tpu.memory_space<vmem>>, %arg6: memref<1x128xf32, #tpu.memory_space<vmem>>, %arg7: memref<16x128xf32, #tpu.memory_space<vmem>>, %arg8: memref<16x128xf32, #tpu.memory_space<vmem>>) attributes {dimension_semantics = [#tpu.dimension_semantics<parallel>, #tpu.dimension_semantics<arbitrary>], iteration_bounds = array<i64: 1, 1>, scalar_prefetch = 0 : i64, scratch_operands = 1 : i64, tpu.core_type = #tpu.core_type<tc>, window_params = [{transform_indices = @transform_0, window_bounds = array<i64: 16, 128>}, {transform_indices = @transform_1, window_bounds = array<i64: 128, 128>}, {transform_indices = @transform_2, window_bounds = array<i64: 1, 128>}, {transform_indices = @transform_3, window_bounds = array<i64: 128, 128>}, {pipeline_mode = #tpu.pipeline_mode<synchronous>, transform_indices = @transform_4, window_bounds = array<i64: 1, 128>}, {transform_indices = @transform_5, window_bounds = array<i64: 16, 128>}]} {
    %c0_i32 = arith.constant 0 : i32
    %0 = arith.cmpi eq, %arg1, %c0_i32 : i32
    %1 = arith.extui %0 : i1 to i32
    %c0_i32_0 = arith.constant 0 : i32
    %2 = arith.cmpi ne, %1, %c0_i32_0 : i32
    scf.if %2 {
      %c0_19 = arith.constant 0 : index
      %c0_20 = arith.constant 0 : index
      %31 = vector.load %arg6[%c0_19, %c0_20] : memref<1x128xf32, #tpu.memory_space<vmem>>, vector<1x128xf32>
      %32 = vector.shape_cast %31 : vector<1x128xf32> to vector<1x128xf32>
      %33 = vector.broadcast %32 : vector<1x128xf32> to vector<16x128xf32>
      %c0_21 = arith.constant 0 : index
      %c0_22 = arith.constant 0 : index
      %34 = vector.load %arg8[%c0_21, %c0_22] : memref<16x128xf32, #tpu.memory_space<vmem>>, vector<16x128xf32>
      tpu.vector_store %arg8[%c0_21, %c0_22], %33 {strides = array<i32>} : memref<16x128xf32, #tpu.memory_space<vmem>>, vector<16x128xf32>,
    } else {
    }
    %c0 = arith.constant 0 : index
    %c0_1 = arith.constant 0 : index
    %3 = vector.load %arg2[%c0, %c0_1] : memref<16x128xbf16, #tpu.memory_space<vmem>>, vector<16x128xbf16>
    %c0_2 = arith.constant 0 : index
    %c0_3 = arith.constant 0 : index
    %4 = vector.load %arg3[%c0_2, %c0_3] : memref<128x128xbf16, #tpu.memory_space<vmem>>, vector<128x128xbf16>
    %cst = arith.constant dense<0.000000e+00> : vector<16x128xf32>
    %5 = tpu.matmul %3, %4, %cst {dimension_numbers = #tpu.dot_dimension_numbers<[1], [0], [0], [1], [0, 0, 1, 1], [], []>} : vector<16x128xbf16>, vector<128x128xbf16>, vector<16x128xf32> -> vector<16x128xf32>
    %c0_4 = arith.constant 0 : index
    %c0_5 = arith.constant 0 : index
    %6 = vector.load %arg4[%c0_4, %c0_5] : memref<1x128xf32, #tpu.memory_space<vmem>>, vector<1x128xf32>
    %7 = vector.broadcast %6 : vector<1x128xf32> to vector<16x128xf32>
    %8 = arith.addf %5, %7 : vector<16x128xf32>
    %cst_6 = arith.constant 5.000000e-01 : f32
    %9 = vector.broadcast %cst_6 : f32 to vector<16x128xf32>
    %10 = arith.mulf %9, %8 : vector<16x128xf32>
    %cst_7 = arith.constant 4.471500e-02 : f32
    %11 = vector.broadcast %cst_7 : f32 to vector<16x128xf32>
    %12 = arith.mulf %11, %8 : vector<16x128xf32>
    %13 = arith.mulf %12, %8 : vector<16x128xf32>
    %14 = arith.mulf %13, %8 : vector<16x128xf32>
    %15 = arith.addf %8, %14 : vector<16x128xf32>
    %cst_8 = arith.constant 0.797884583 : f32
    %16 = vector.broadcast %cst_8 : f32 to vector<16x128xf32>
    %17 = arith.mulf %16, %15 : vector<16x128xf32>
    %18 = math.tanh %17 : vector<16x128xf32>
    %cst_9 = arith.constant 1.000000e+00 : f32
    %19 = vector.broadcast %cst_9 : f32 to vector<16x128xf32>
    %20 = arith.addf %19, %18 : vector<16x128xf32>
    %21 = arith.mulf %10, %20 : vector<16x128xf32>
    %c0_10 = arith.constant 0 : index
    %c0_11 = arith.constant 0 : index
    %22 = vector.load %arg8[%c0_10, %c0_11] : memref<16x128xf32, #tpu.memory_space<vmem>>, vector<16x128xf32>
    %23 = arith.truncf %21 : vector<16x128xf32> to vector<16x128xbf16>
    %c0_12 = arith.constant 0 : index
    %c0_13 = arith.constant 0 : index
    %24 = vector.load %arg5[%c0_12, %c0_13] : memref<128x128xbf16, #tpu.memory_space<vmem>>, vector<128x128xbf16>
    %cst_14 = arith.constant dense<0.000000e+00> : vector<16x128xf32>
    %25 = tpu.matmul %23, %24, %cst_14 {dimension_numbers = #tpu.dot_dimension_numbers<[1], [0], [0], [1], [0, 0, 1, 1], [], []>} : vector<16x128xbf16>, vector<128x128xbf16>, vector<16x128xf32> -> vector<16x128xf32>
    %26 = arith.addf %22, %25 : vector<16x128xf32>
    %c0_15 = arith.constant 0 : index
    %c0_16 = arith.constant 0 : index
    %27 = vector.load %arg8[%c0_15, %c0_16] : memref<16x128xf32, #tpu.memory_space<vmem>>, vector<16x128xf32>
    tpu.vector_store %arg8[%c0_15, %c0_16], %26 {strides = array<i32>} : memref<16x128xf32, #tpu.memory_space<vmem>>, vector<16x128xf32>,
    %c0_i32_17 = arith.constant 0 : i32
    %28 = arith.cmpi eq, %arg1, %c0_i32_17 : i32
    %29 = arith.extui %28 : i1 to i32
    %c0_i32_18 = arith.constant 0 : i32
    %30 = arith.cmpi ne, %29, %c0_i32_18 : i32
    scf.if %30 {
      %c0_19 = arith.constant 0 : index
      %c0_20 = arith.constant 0 : index
      %31 = vector.load %arg8[%c0_19, %c0_20] : memref<16x128xf32, #tpu.memory_space<vmem>>, vector<16x128xf32>
      %c0_21 = arith.constant 0 : index
      %c0_22 = arith.constant 0 : index
      %32 = vector.load %arg7[%c0_21, %c0_22] : memref<16x128xf32, #tpu.memory_space<vmem>>, vector<16x128xf32>
      tpu.vector_store %arg7[%c0_21, %c0_22], %31 {strides = array<i32>} : memref<16x128xf32, #tpu.memory_space<vmem>>, vector<16x128xf32>,
    } else {
    }
    return
  }
  func.func @transform_0(%arg0: i32, %arg1: i32) -> (i32, i32) {
    %c0_i32 = arith.constant 0 : i32
    %c0_i32_0 = arith.constant 0 : i32
    return %arg0, %c0_i32 : i32, i32
  }
  func.func @transform_1(%arg0: i32, %arg1: i32) -> (i32, i32) {
    %c2_i32 = arith.constant 2 : i32
    %c0_i32 = arith.constant 0 : i32
    %0 = arith.cmpi eq, %c2_i32, %c0_i32 : i32
    %c1_i32 = arith.constant 1 : i32
    %1 = arith.select %0, %c1_i32, %c2_i32 : i32
    %2 = arith.remsi %arg0, %1 : i32
    %c0_i32_0 = arith.constant 0 : i32
    %3 = arith.cmpi ne, %2, %c0_i32_0 : i32
    %c0_i32_1 = arith.constant 0 : i32
    %4 = arith.cmpi slt, %2, %c0_i32_1 : i32
    %c0_i32_2 = arith.constant 0 : i32
    %5 = arith.cmpi slt, %1, %c0_i32_2 : i32
    %6 = arith.xori %4, %5 : i1
    %7 = arith.andi %6, %3 : i1
    %8 = arith.addi %2, %1 : i32
    %9 = arith.select %7, %8, %2 : i32
    %c2_i32_3 = arith.constant 2 : i32
    %10 = arith.muli %c2_i32_3, %arg1 : i32
    %c0_i32_4 = arith.constant 0 : i32
    %11 = arith.subi %c0_i32_4, %10 : i32
    %12 = arith.muli %9, %11 : i32
    %13 = arith.addi %arg1, %12 : i32
    %c0_i32_5 = arith.constant 0 : i32
    %c0_i32_6 = arith.constant 0 : i32
    return %c0_i32_5, %13 : i32, i32
  }
  func.func @transform_2(%arg0: i32, %arg1: i32) -> (i32, i32) {
    %c2_i32 = arith.constant 2 : i32
    %c0_i32 = arith.constant 0 : i32
    %0 = arith.cmpi eq, %c2_i32, %c0_i32 : i32
    %c1_i32 = arith.constant 1 : i32
    %1 = arith.select %0, %c1_i32, %c2_i32 : i32
    %2 = arith.remsi %arg0, %1 : i32
    %c0_i32_0 = arith.constant 0 : i32
    %3 = arith.cmpi ne, %2, %c0_i32_0 : i32
    %c0_i32_1 = arith.constant 0 : i32
    %4 = arith.cmpi slt, %2, %c0_i32_1 : i32
    %c0_i32_2 = arith.constant 0 : i32
    %5 = arith.cmpi slt, %1, %c0_i32_2 : i32
    %6 = arith.xori %4, %5 : i1
    %7 = arith.andi %6, %3 : i1
    %8 = arith.addi %2, %1 : i32
    %9 = arith.select %7, %8, %2 : i32
    %c2_i32_3 = arith.constant 2 : i32
    %10 = arith.muli %c2_i32_3, %arg1 : i32
    %c0_i32_4 = arith.constant 0 : i32
    %11 = arith.subi %c0_i32_4, %10 : i32
    %12 = arith.muli %9, %11 : i32
    %13 = arith.addi %arg1, %12 : i32
    %c0_i32_5 = arith.constant 0 : i32
    %c0_i32_6 = arith.constant 0 : i32
    return %c0_i32_5, %13 : i32, i32
  }
  func.func @transform_3(%arg0: i32, %arg1: i32) -> (i32, i32) {
    %c2_i32 = arith.constant 2 : i32
    %c0_i32 = arith.constant 0 : i32
    %0 = arith.cmpi eq, %c2_i32, %c0_i32 : i32
    %c1_i32 = arith.constant 1 : i32
    %1 = arith.select %0, %c1_i32, %c2_i32 : i32
    %2 = arith.remsi %arg0, %1 : i32
    %c0_i32_0 = arith.constant 0 : i32
    %3 = arith.cmpi ne, %2, %c0_i32_0 : i32
    %c0_i32_1 = arith.constant 0 : i32
    %4 = arith.cmpi slt, %2, %c0_i32_1 : i32
    %c0_i32_2 = arith.constant 0 : i32
    %5 = arith.cmpi slt, %1, %c0_i32_2 : i32
    %6 = arith.xori %4, %5 : i1
    %7 = arith.andi %6, %3 : i1
    %8 = arith.addi %2, %1 : i32
    %9 = arith.select %7, %8, %2 : i32
    %c2_i32_3 = arith.constant 2 : i32
    %10 = arith.muli %c2_i32_3, %arg1 : i32
    %c0_i32_4 = arith.constant 0 : i32
    %11 = arith.subi %c0_i32_4, %10 : i32
    %12 = arith.muli %9, %11 : i32
    %13 = arith.addi %arg1, %12 : i32
    %c0_i32_5 = arith.constant 0 : i32
    %c0_i32_6 = arith.constant 0 : i32
    return %13, %c0_i32_5 : i32, i32
  }
  func.func @transform_4(%arg0: i32, %arg1: i32) -> (i32, i32) {
    %c0_i32 = arith.constant 0 : i32
    %c0_i32_0 = arith.constant 0 : i32
    %c0_i32_1 = arith.constant 0 : i32
    return %c0_i32, %c0_i32_0 : i32, i32
  }
  func.func @transform_5(%arg0: i32, %arg1: i32) -> (i32, i32) {
    %c0_i32 = arith.constant 0 : i32
    %c0_i32_0 = arith.constant 0 : i32
    return %arg0, %c0_i32 : i32, i32
  }
}

</mosaic_0001>

<llo_original>
// kernel: _ffn_pallas.1
$region0: #{_ffn_pallas.1}
  #allocation0 [shape = 'u32[]', space=smem, size = 0x4, offset = 0x4, fixed_abs, tag = 'smem constant byte address 0x4 - core index']
  #allocation1 [shape = 'u32[144,128]{1,0:T(1,128)}', space=vmem, size = 0x12000, scoped, tag = 'internal scratch']
  #allocation2 [shape = 'f32[16,128]{1,0:T(8,128)}', space=vmem, size = 0x2000, scoped, tag = 'scratch operand']
  %s0 = inlined_call_operand.vmem [shape: bf16[16,128], index: 0, kind: input, shape index: {}]
  %s1 = inlined_call_operand.vmem [shape: bf16[128,128], index: 1, kind: input, shape index: {}]
  %s2 = inlined_call_operand.vmem [shape: f32[1,128], index: 2, kind: input, shape index: {}]
  %s3 = inlined_call_operand.vmem [shape: bf16[128,128], index: 3, kind: input, shape index: {}]
  %s4 = inlined_call_operand.vmem [shape: f32[1,128], index: 4, kind: input, shape index: {}]
  %s5 = inlined_call_operand.hbm [shape: f32[16,128], index: 5, kind: output, shape index: {}]
  %s6 = sld [smem:[#allocation0]]
  $region38: #{_ffn_pallas.1} parent=0
    _
  %s8 = ssub.s32 1, %s6
  %s9 = scalar_select 0, %s8, %s6
  $region1: #{_ffn_pallas.1} parent=0
    #allocation3 [shape = 'u8[8192]{0}', space=vmem, size = 0x2000, scoped, tag = 'output window, operand 0, single buffered']
    #allocation4 [shape = 's32[1]{0}', space=sflag, size = 0x4, scoped, tag = 'scoped memory for _ffn_pallas.1']
    %10 = vsyncpa [#allocation4], 0
    // Predicated region
    $region2: #{_ffn_pallas.1} parent=1 // pred_check
      _
    $region3: #{_ffn_pallas.1} parent=1 // pred_check_branch
      %12 = sbr.rel (0) target = $region5
    $region4: #{_ffn_pallas.1} parent=1 // pred_region
      _
    $region5: #{_ffn_pallas.1} parent=1 // pred_fallthru
      _
    // Predicated region
    $region6: #{_ffn_pallas.1} parent=1 // pred_check
      _
    $region7: #{_ffn_pallas.1} parent=1 // pred_check_branch
      %14 = sbr.rel (0) target = $region9
    $region8: #{_ffn_pallas.1} parent=1 // pred_region
      %s15 = ssub.s32 0, 0
      %s16 = ssub.s32 0, 0
      %p17 = scmp.ne.s32.totalorder 0, 0
      %p18 = scmp.lt.s32.totalorder 0, 0
      %p19 = pnand %p18, %p17
      %p20 = pneg %p19
      %s21 = sadd.s32 0, 2
      %s22 = scalar_select %p20, %s21, 0
      %s23 = smul.u32 0, 2
      %s24 = ssub.s32 0, %s23
      %s25 = smul.u32 %s22, %s24
      %s26 = sadd.s32 0, %s25
      %p27 = scmp.lt.s32.totalorder %s26, 0
      %s28 = scalar_select %p27, %s26, 0
      %s29 = smul.addr %s28, 4
      %s30 = scalar_lea.vmem %s1, %s29
      %s31 = ssub.s32 0, 0
      %s32 = ssub.s32 0, 0
      %p33 = scmp.ne.s32.totalorder 0, 0
      %p34 = scmp.lt.s32.totalorder 0, 0
      %p35 = pnand %p34, %p33
      %p36 = pneg %p35
      %s37 = sadd.s32 0, 2
      %s38 = scalar_select %p36, %s37, 0
      %s39 = smul.u32 0, 2
      %s40 = ssub.s32 0, %s39
      %s41 = smul.u32 %s38, %s40
      %s42 = sadd.s32 0, %s41
    $region9: #{_ffn_pallas.1} parent=1 // pred_fallthru
      _
    // Predicated region
    $region10: #{_ffn_pallas.1} parent=1 // pred_check
      _
    $region11: #{_ffn_pallas.1} parent=1 // pred_check_branch
      %44 = sbr.rel (0) target = $region13
    $region12: #{_ffn_pallas.1} parent=1 // pred_region
      %s45 = ssub.s32 0, 0
      %s46 = ssub.s32 0, 0
      %p47 = scmp.ne.s32.totalorder 0, 0
      %p48 = scmp.lt.s32.totalorder 0, 0
      %p49 = pnand %p48, %p47
      %p50 = pneg %p49
      %s51 = sadd.s32 0, 2
      %s52 = scalar_select %p50, %s51, 0
      %s53 = smul.u32 0, 2
      %s54 = ssub.s32 0, %s53
      %s55 = smul.u32 %s52, %s54
      %s56 = sadd.s32 0, %s55
      %p57 = scmp.lt.s32.totalorder %s56, 0
      %s58 = scalar_select %p57, %s56, 0
      %s59 = scalar_lea.vmem %s2, %s58
      %s60 = ssub.s32 0, 0
      %s61 = ssub.s32 0, 0
      %p62 = scmp.ne.s32.totalorder 0, 0
      %p63 = scmp.lt.s32.totalorder 0, 0
      %p64 = pnand %p63, %p62
      %p65 = pneg %p64
      %s66 = sadd.s32 0, 2
      %s67 = scalar_select %p65, %s66, 0
      %s68 = smul.u32 0, 2
      %s69 = ssub.s32 0, %s68
      %s70 = smul.u32 %s67, %s69
      %s71 = sadd.s32 0, %s70
    $region13: #{_ffn_pallas.1} parent=1 // pred_fallthru
      _
    // Predicated region
    $region14: #{_ffn_pallas.1} parent=1 // pred_check
      _
    $region15: #{_ffn_pallas.1} parent=1 // pred_check_branch
      %73 = sbr.rel (0) target = $region17
    $region16: #{_ffn_pallas.1} parent=1 // pred_region
      %s74 = ssub.s32 0, 0
      %s75 = ssub.s32 0, 0
      %p76 = scmp.ne.s32.totalorder 0, 0
      %p77 = scmp.lt.s32.totalorder 0, 0
      %p78 = pnand %p77, %p76
      %p79 = pneg %p78
      %s80 = sadd.s32 0, 2
      %s81 = scalar_select %p79, %s80, 0
      %s82 = smul.u32 0, 2
      %s83 = ssub.s32 0, %s82
      %s84 = smul.u32 %s81, %s83
      %s85 = sadd.s32 0, %s84
      %s86 = smul.u32 16, %s85
      %p87 = scmp.lt.s32.totalorder %s86, 15
      %s88 = scalar_select %p87, %s86, 15
      %s89 = smul.addr %s88, 4
      %s90 = scalar_lea.vmem %s3, %s89
      %s91 = ssub.s32 0, 0
      %s92 = ssub.s32 0, 0
      %p93 = scmp.ne.s32.totalorder 0, 0
      %p94 = scmp.lt.s32.totalorder 0, 0
      %p95 = pnand %p94, %p93
      %p96 = pneg %p95
      %s97 = sadd.s32 0, 2
      %s98 = scalar_select %p96, %s97, 0
      %s99 = smul.u32 0, 2
      %s100 = ssub.s32 0, %s99
      %s101 = smul.u32 %s98, %s100
      %s102 = sadd.s32 0, %s101
      %s103 = smul.u32 16, %s102
    $region17: #{_ffn_pallas.1} parent=1 // pred_fallthru
      _
    // Predicated region
    $region18: #{_ffn_pallas.1} parent=1 // pred_check
      _
    $region19: #{_ffn_pallas.1} parent=1 // pred_check_branch
      %105 = sbr.rel (0) target = $region21
    $region20: #{_ffn_pallas.1} parent=1 // pred_region
      _
    $region21: #{_ffn_pallas.1} parent=1 // pred_fallthru
      _
    %s106 = ssub.s32 0, 0
    %s107 = ssub.s32 0, 0
    %p108 = scmp.ne.s32.totalorder 0, 0
    %p109 = scmp.lt.s32.totalorder 0, 0
    %p110 = pnand %p109, %p108
    %p111 = pneg %p110
    %s112 = sadd.s32 0, 2
    %s113 = scalar_select %p111, %s112, 0
    %s114 = smul.u32 0, 2
    %s115 = ssub.s32 0, %s114
    %s116 = smul.u32 %s113, %s115
    %s117 = sadd.s32 0, %s116
    %p118 = scmp.lt.s32.totalorder %s117, 0
    %s119 = scalar_select %p118, %s117, 0
    %s120 = smul.addr %s119, 4
    %s121 = scalar_lea.vmem %s1, %s120
    %s122 = ssub.s32 0, 0
    %s123 = ssub.s32 0, 0
    %p124 = scmp.ne.s32.totalorder 0, 0
    %p125 = scmp.lt.s32.totalorder 0, 0
    %p126 = pnand %p125, %p124
    %p127 = pneg %p126
    %s128 = sadd.s32 0, 2
    %s129 = scalar_select %p127, %s128, 0
    %s130 = smul.u32 0, 2
    %s131 = ssub.s32 0, %s130
    %s132 = smul.u32 %s129, %s131
    %s133 = sadd.s32 0, %s132
    %p134 = scmp.lt.s32.totalorder %s133, 0
    %s135 = scalar_select %p134, %s133, 0
    %s136 = scalar_lea.vmem %s2, %s135
    %s137 = ssub.s32 0, 0
    %s138 = ssub.s32 0, 0
    %p139 = scmp.ne.s32.totalorder 0, 0
    %p140 = scmp.lt.s32.totalorder 0, 0
    %p141 = pnand %p140, %p139
    %p142 = pneg %p141
    %s143 = sadd.s32 0, 2
    %s144 = scalar_select %p142, %s143, 0
    %s145 = smul.u32 0, 2
    %s146 = ssub.s32 0, %s145
    %s147 = smul.u32 %s144, %s146
    %s148 = sadd.s32 0, %s147
    %s149 = smul.u32 16, %s148
    %p150 = scmp.lt.s32.totalorder %s149, 15
    %s151 = scalar_select %p150, %s149, 15
    %s152 = smul.addr %s151, 4
    %s153 = scalar_lea.vmem %s3, %s152
    %s154 = ssub.s32 0, 0
    %s155 = ssub.s32 0, 0
    %p156 = scmp.ne.s32.totalorder 0, 0
    %p157 = scmp.lt.s32.totalorder 0, 0
    %p158 = pnand %p157, %p156
    %p159 = pneg %p158
    %s160 = sadd.s32 0, 2
    %s161 = scalar_select %p159, %s160, 0
    %s162 = smul.u32 0, 2
    %s163 = ssub.s32 0, %s162
    %s164 = smul.u32 %s161, %s163
    %s165 = sadd.s32 0, %s164
    %p166 = scmp.lt.s32.totalorder %s165, 0
    %s167 = scalar_select %p166, %s165, 0
    %s168 = smul.addr %s167, 4
    %s169 = scalar_lea.vmem %s1, %s168
    %s170 = ssub.s32 0, 0
    %s171 = ssub.s32 0, 0
    %p172 = scmp.ne.s32.totalorder 0, 0
    %p173 = scmp.lt.s32.totalorder 0, 0
    %p174 = pnand %p173, %p172
    %p175 = pneg %p174
    %s176 = sadd.s32 0, 2
    %s177 = scalar_select %p175, %s176, 0
    %s178 = smul.u32 0, 2
    %s179 = ssub.s32 0, %s178
    %s180 = smul.u32 %s177, %s179
    %s181 = sadd.s32 0, %s180
    %s182 = ssub.s32 0, 0
    %s183 = ssub.s32 0, 0
    %p184 = scmp.ne.s32.totalorder 0, 0
    %p185 = scmp.lt.s32.totalorder 0, 0
    %p186 = pnand %p185, %p184
    %p187 = pneg %p186
    %s188 = sadd.s32 0, 2
    %s189 = scalar_select %p187, %s188, 0
    %s190 = smul.u32 0, 2
    %s191 = ssub.s32 0, %s190
    %s192 = smul.u32 %s189, %s191
    %s193 = sadd.s32 0, %s192
    %p194 = scmp.lt.s32.totalorder %s193, 0
    %s195 = scalar_select %p194, %s193, 0
    %s196 = scalar_lea.vmem %s2, %s195
    %s197 = ssub.s32 0, 0
    %s198 = ssub.s32 0, 0
    %p199 = scmp.ne.s32.totalorder 0, 0
    %p200 = scmp.lt.s32.totalorder 0, 0
    %p201 = pnand %p200, %p199
    %p202 = pneg %p201
    %s203 = sadd.s32 0, 2
    %s204 = scalar_select %p202, %s203, 0
    %s205 = smul.u32 0, 2
    %s206 = ssub.s32 0, %s205
    %s207 = smul.u32 %s204, %s206
    %s208 = sadd.s32 0, %s207
    %s209 = ssub.s32 0, 0
    %s210 = ssub.s32 0, 0
    %p211 = scmp.ne.s32.totalorder 0, 0
    %p212 = scmp.lt.s32.totalorder 0, 0
    %p213 = pnand %p212, %p211
    %p214 = pneg %p213
    %s215 = sadd.s32 0, 2
    %s216 = scalar_select %p214, %s215, 0
    %s217 = smul.u32 0, 2
    %s218 = ssub.s32 0, %s217
    %s219 = smul.u32 %s216, %s218
    %s220 = sadd.s32 0, %s219
    %s221 = smul.u32 16, %s220
    %p222 = scmp.lt.s32.totalorder %s221, 15
    %s223 = scalar_select %p222, %s221, 15
    %s224 = smul.addr %s223, 4
    %s225 = scalar_lea.vmem %s3, %s224
    %s226 = ssub.s32 0, 0
    %s227 = ssub.s32 0, 0
    %p228 = scmp.ne.s32.totalorder 0, 0
    %p229 = scmp.lt.s32.totalorder 0, 0
    %p230 = pnand %p229, %p228
    %p231 = pneg %p230
    %s232 = sadd.s32 0, 2
    %s233 = scalar_select %p231, %s232, 0
    %s234 = smul.u32 0, 2
    %s235 = ssub.s32 0, %s234
    %s236 = smul.u32 %s233, %s235
    %s237 = sadd.s32 0, %s236
    %s238 = smul.u32 16, %s237
    %p240 = scmp.eq.s32.totalorder 0, 0
    // Predicated region
    $region22: #{_ffn_pallas.1} parent=1 // pred_check
      %p241 = pneg %p240
    $region23: #{_ffn_pallas.1} parent=1 // pred_check_branch
      %243 = sbr.rel (%p241) target = $region25
    $region24: #{_ffn_pallas.1} parent=1 // pred_region
      %v244 = vld [vmem:[%s4] sm:$0x1]
      %v246 = vlaneseq
      %v247 = vshrl.u32 %v246, 7
      %v248 = vsub.s32 0, %v247
      %v249 = vrot.slane %v244, %v248
      %251 = vst [vmem:[#allocation2] sm:$0xff] %v249
      %252 = vst [vmem:[#allocation2 + $0x8] sm:$0xff] %v249
    $region25: #{_ffn_pallas.1} parent=1 // pred_fallthru
      _
    %v253 = vld [vmem:[%s0] sm:$0xf]
    %v254 = vld [vmem:[%s0 + $0x4] sm:$0xf]
    %v255 = vld [vmem:[%s169] sm:$0xf]
    %v256 = vld [vmem:[%s169 + $0x4] sm:$0xf]
    %v257 = vld [vmem:[%s169 + $0x8] sm:$0xf]
    %v258 = vld [vmem:[%s169 + $0xc] sm:$0xf]
    %v259 = vld [vmem:[%s169 + $0x10] sm:$0xf]
    %v260 = vld [vmem:[%s169 + $0x14] sm:$0xf]
    %v261 = vld [vmem:[%s169 + $0x18] sm:$0xf]
    %v262 = vld [vmem:[%s169 + $0x1c] sm:$0xf]
    %v263 = vld [vmem:[%s169 + $0x20] sm:$0xf]
    %v264 = vld [vmem:[%s169 + $0x24] sm:$0xf]
    %v265 = vld [vmem:[%s169 + $0x28] sm:$0xf]
    %v266 = vld [vmem:[%s169 + $0x2c] sm:$0xf]
    %v267 = vld [vmem:[%s169 + $0x30] sm:$0xf]
    %v268 = vld [vmem:[%s169 + $0x34] sm:$0xf]
    %v269 = vld [vmem:[%s169 + $0x38] sm:$0xf]
    %v270 = vld [vmem:[%s169 + $0x3c] sm:$0xf]
    %v271 = vld [vmem:[%s196] sm:$0x1]
    %v273 = vlaneseq
    %v274 = vshrl.u32 %v273, 7
    %v275 = vsub.s32 0, %v274
    %v276 = vrot.slane %v271, %v275
    %v280 = vunpack.c.l.b16 %v253
    %v281 = vunpack.c.l.b16 %v254
    %v282 = vpack.c.b16 %v281, %v280
    %v300 = vunpack.c.l.b16 %v255
    %v301 = vunpack.c.l.b16 %v256
    %v302 = vunpack.c.l.b16 %v257
    %v303 = vunpack.c.l.b16 %v258
    %v304 = vunpack.c.l.b16 %v259
    %v305 = vunpack.c.l.b16 %v260
    %v306 = vunpack.c.l.b16 %v261
    %v307 = vunpack.c.l.b16 %v262
    %v308 = vunpack.c.l.b16 %v263
    %v309 = vunpack.c.l.b16 %v264
    %v310 = vunpack.c.l.b16 %v265
    %v311 = vunpack.c.l.b16 %v266
    %v312 = vunpack.c.l.b16 %v267
    %v313 = vunpack.c.l.b16 %v268
    %v314 = vunpack.c.l.b16 %v269
    %v315 = vunpack.c.l.b16 %v270
    %v316 = vpack.c.b16 %v301, %v300
    %v317 = vpack.c.b16 %v303, %v302
    %v318 = vpack.c.b16 %v305, %v304
    %v319 = vpack.c.b16 %v307, %v306
    %v320 = vpack.c.b16 %v309, %v308
    %v321 = vpack.c.b16 %v311, %v310
    %v322 = vpack.c.b16 %v313, %v312
    %v323 = vpack.c.b16 %v315, %v314
    %332 = vmatprep.subr.bf16.mxu0 0
    %333 = vmatpush1.bf16.msra.mxu0 %v316
    %334 = vmatprep.subr.bf16.mxu0 0
    %335 = vmatpush1.bf16.msra.mxu0 %v317
    %336 = vmatprep.subr.bf16.mxu0 0
    %337 = vmatpush1.bf16.msra.mxu0 %v318
    %338 = vmatprep.subr.bf16.mxu0 0
    %339 = vmatpush1.bf16.msra.mxu0 %v319
    %340 = vmatprep.subr.bf16.mxu0 0
    %341 = vmatpush1.bf16.msra.mxu0 %v320
    %342 = vmatprep.subr.bf16.mxu0 0
    %343 = vmatpush1.bf16.msra.mxu0 %v321
    %344 = vmatprep.subr.bf16.mxu0 0
    %345 = vmatpush1.bf16.msra.mxu0 %v322
    %346 = vmatprep.subr.bf16.mxu0 0
    %347 = vmatpush1.bf16.msra.mxu0 %v323
    %348 = vmatprep.subr.bf16.mxu0 0
    %349 = vmatpush1.bf16.msra.mxu0 0
    %350 = vmatprep.subr.bf16.mxu0 0
    %351 = vmatpush1.bf16.msra.mxu0 0
    %352 = vmatprep.subr.bf16.mxu0 0
    %353 = vmatpush1.bf16.msra.mxu0 0
    %354 = vmatprep.subr.bf16.mxu0 0
    %355 = vmatpush1.bf16.msra.mxu0 0
    %356 = vmatprep.subr.bf16.mxu0 0
    %357 = vmatpush1.bf16.msra.mxu0 0
    %358 = vmatprep.subr.bf16.mxu0 0
    %359 = vmatpush1.bf16.msra.mxu0 0
    %360 = vmatprep.subr.bf16.mxu0 0
    %361 = vmatpush1.bf16.msra.mxu0 0
    %362 = vmatprep.subr.bf16.mxu0 0
    %363 = vmatpush1.bf16.msra.mxu0 0
    %364 = vmatprep.mubr.bf16.mxu0 0
    %365 = vmatmul.mubr.bf16.gmra.mrb[0].mxu0 %v282
    %v366 = vpop.f32.mrb[0].mxu0
    %v367 = vadd.f32 %v276, %v366
    %v368 = vpop.f32.mrb[0].mxu0
    %v369 = vpop.f32.mrb[0].mxu0
    %v370 = vadd.f32 %v276, %v369
    %v371 = vpop.f32.mrb[0].mxu0
    %372 = vdwg.mxu0
    %v373 = vmul.f32 %v367, 0.5
    %v374 = vmul.f32 %v370, 0.5
    %v375 = vmul.f32 %v367, 0.044715
    %v376 = vmul.f32 %v370, 0.044715
    %v377 = vmul.f32 %v375, %v367
    %v378 = vmul.f32 %v376, %v370
    %v379 = vmul.f32 %v377, %v367
    %v380 = vmul.f32 %v378, %v370
    %v381 = vadd.f32 %v367, %v379
    %v382 = vadd.f32 %v370, %v380
    %v383 = vmul.f32 %v381, 0.7978846
    %v384 = vmul.f32 %v382, 0.7978846
    %v385 = vtanh.pop %v383
    %v386 = vtanh.pop %v384
    %v387 = vadd.f32 %v385, 1.0
    %v388 = vadd.f32 %v386, 1.0
    %v389 = vmul.f32 %v373, %v387
    %v390 = vmul.f32 %v374, %v388
    %v391 = vld [vmem:[#allocation2] sm:$0xff]
    %v392 = vld [vmem:[#allocation2 + $0x8] sm:$0xff]
    %v393 = vpack.c.bf16 %v390, %v389
    %v394 = vld [vmem:[%s225] sm:$0xf]
    %v395 = vld [vmem:[%s225 + $0x4] sm:$0xf]
    %v396 = vld [vmem:[%s225 + $0x8] sm:$0xf]
    %v397 = vld [vmem:[%s225 + $0xc] sm:$0xf]
    %v398 = vld [vmem:[%s225 + $0x10] sm:$0xf]
    %v399 = vld [vmem:[%s225 + $0x14] sm:$0xf]
    %v400 = vld [vmem:[%s225 + $0x18] sm:$0xf]
    %v401 = vld [vmem:[%s225 + $0x1c] sm:$0xf]
    %v402 = vld [vmem:[%s225 + $0x20] sm:$0xf]
    %v403 = vld [vmem:[%s225 + $0x24] sm:$0xf]
    %v404 = vld [vmem:[%s225 + $0x28] sm:$0xf]
    %v405 = vld [vmem:[%s225 + $0x2c] sm:$0xf]
    %v406 = vld [vmem:[%s225 + $0x30] sm:$0xf]
    %v407 = vld [vmem:[%s225 + $0x34] sm:$0xf]
    %v408 = vld [vmem:[%s225 + $0x38] sm:$0xf]
    %v409 = vld [vmem:[%s225 + $0x3c] sm:$0xf]
    %v426 = vunpack.c.l.b16 %v394
    %v427 = vunpack.c.l.b16 %v395
    %v428 = vunpack.c.l.b16 %v396
    %v429 = vunpack.c.l.b16 %v397
    %v430 = vunpack.c.l.b16 %v398
    %v431 = vunpack.c.l.b16 %v399
    %v432 = vunpack.c.l.b16 %v400
    %v433 = vunpack.c.l.b16 %v401
    %v434 = vunpack.c.l.b16 %v402
    %v435 = vunpack.c.l.b16 %v403
    %v436 = vunpack.c.l.b16 %v404
    %v437 = vunpack.c.l.b16 %v405
    %v438 = vunpack.c.l.b16 %v406
    %v439 = vunpack.c.l.b16 %v407
    %v440 = vunpack.c.l.b16 %v408
    %v441 = vunpack.c.l.b16 %v409
    %v442 = vpack.c.b16 %v427, %v426
    %v443 = vpack.c.b16 %v429, %v428
    %v444 = vpack.c.b16 %v431, %v430
    %v445 = vpack.c.b16 %v433, %v432
    %v446 = vpack.c.b16 %v435, %v434
    %v447 = vpack.c.b16 %v437, %v436
    %v448 = vpack.c.b16 %v439, %v438
    %v449 = vpack.c.b16 %v441, %v440
    %458 = vmatprep.subr.bf16.mxu0 0
    %459 = vmatpush1.bf16.msra.mxu0 %v442
    %460 = vmatprep.subr.bf16.mxu0 0
    %461 = vmatpush1.bf16.msra.mxu0 %v443
    %462 = vmatprep.subr.bf16.mxu0 0
    %463 = vmatpush1.bf16.msra.mxu0 %v444
    %464 = vmatprep.subr.bf16.mxu0 0
    %465 = vmatpush1.bf16.msra.mxu0 %v445
    %466 = vmatprep.subr.bf16.mxu0 0
    %467 = vmatpush1.bf16.msra.mxu0 %v446
    %468 = vmatprep.subr.bf16.mxu0 0
    %469 = vmatpush1.bf16.msra.mxu0 %v447
    %470 = vmatprep.subr.bf16.mxu0 0
    %471 = vmatpush1.bf16.msra.mxu0 %v448
    %472 = vmatprep.subr.bf16.mxu0 0
    %473 = vmatpush1.bf16.msra.mxu0 %v449
    %474 = vmatprep.subr.bf16.mxu0 0
    %475 = vmatpush1.bf16.msra.mxu0 0
    %476 = vmatprep.subr.bf16.mxu0 0
    %477 = vmatpush1.bf16.msra.mxu0 0
    %478 = vmatprep.subr.bf16.mxu0 0
    %479 = vmatpush1.bf16.msra.mxu0 0
    %480 = vmatprep.subr.bf16.mxu0 0
    %481 = vmatpush1.bf16.msra.mxu0 0
    %482 = vmatprep.subr.bf16.mxu0 0
    %483 = vmatpush1.bf16.msra.mxu0 0
    %484 = vmatprep.subr.bf16.mxu0 0
    %485 = vmatpush1.bf16.msra.mxu0 0
    %486 = vmatprep.subr.bf16.mxu0 0
    %487 = vmatpush1.bf16.msra.mxu0 0
    %488 = vmatprep.subr.bf16.mxu0 0
    %489 = vmatpush1.bf16.msra.mxu0 0
    %490 = vmatprep.mubr.bf16.mxu0 0
    %491 = vmatmul.mubr.bf16.gmra.mrb[0].mxu0 %v393
    %v492 = vpop.f32.mrb[0].mxu0
    %v493 = vadd.f32 0.0, %v492
    %v494 = vpop.f32.mrb[0].mxu0
    %v495 = vpop.f32.mrb[0].mxu0
    %v496 = vadd.f32 0.0, %v495
    %v497 = vpop.f32.mrb[0].mxu0
    %498 = vdwg.mxu0
    %v499 = vadd.f32 %v391, %v493
    %v500 = vadd.f32 %v392, %v496
    %501 = vst [vmem:[#allocation2] sm:$0xff] %v499
    %502 = vst [vmem:[#allocation2 + $0x8] sm:$0xff] %v500
    // Predicated region
    $region26: #{_ffn_pallas.1} parent=1 // pred_check
      %p503 = pneg %p240
    $region27: #{_ffn_pallas.1} parent=1 // pred_check_branch
      %505 = sbr.rel (%p503) target = $region29
    $region28: #{_ffn_pallas.1} parent=1 // pred_region
      %v506 = vld [vmem:[#allocation2] sm:$0xff]
      %v507 = vld [vmem:[#allocation2 + $0x8] sm:$0xff]
      %508 = vst [vmem:[#allocation3] sm:$0xff] %v506
      %509 = vst [vmem:[#allocation3 + $0x8] sm:$0xff] %v507
    $region29: #{_ffn_pallas.1} parent=1 // pred_fallthru
      _
    // Predicated region
    $region30: #{_ffn_pallas.1} parent=1 // pred_check
      _
    $region31: #{_ffn_pallas.1} parent=1 // pred_check_branch
      %511 = sbr.rel (0) target = $region33
    $region32: #{_ffn_pallas.1} parent=1 // pred_region
      %s513 = ssub.s32 256, 256
      %514 = vsyncadd [#allocation4], %s513
      %s515 = sshll.u32 [#allocation3], 4
      %s516 = int_to_ptr.vmem [resolvable:$true] %s515
      %521 = dma.vmem_to_hbm [thread:$0]  %s516, 256, %s5, [#allocation4], 128, 128, 8
    $region33: #{_ffn_pallas.1} parent=1 // pred_fallthru
      _
    // Predicated region
    $region34: #{_ffn_pallas.1} parent=1 // pred_check
      _
    $region35: #{_ffn_pallas.1} parent=1 // pred_check_branch
      %523 = sbr.rel (0) target = $region37
    $region36: #{_ffn_pallas.1} parent=1 // pred_region
      %524 = dma.done [#allocation4], 256
    $region37: #{_ffn_pallas.1} parent=1 // pred_fallthru
      _
    %525 = vsyncpa [#allocation4], 1

</llo_original>
